<compile_context>
chip_gen: v7x
topology: tpu7x:2x2x1
jax: 0.10.0
libtpu: 0.0.40
codegen_flags: <defaults>
</compile_context>

<pallas_src>
import functools

import jax
import jax.numpy as jnp
from jax.experimental import pallas as pl
from jax.experimental.pallas import tpu as pltpu

LANES = 128
BLOCK_ELEMS = 1024 * 1024   # ~4 MiB per f32 block; in+out double-buffered = 16 MiB


def _act_prt_kernel(alpha_ref, x_ref, o_ref, *, compute_dtype):
    """Elementwise hot path: (relu + prelu + tanh) / 3, fused."""
    a = alpha_ref[0].astype(compute_dtype)          # one SMEM scalar read per block
    x = x_ref[...].astype(compute_dtype)
    pos_scale = jnp.asarray(2.0 / 3.0, compute_dtype)
    third = jnp.asarray(1.0 / 3.0, compute_dtype)
    neg_scale = a * third
    # relu(x) + prelu(x) == where(x >= 0, 2x, a*x); final 1/3 folded into scales.
    y = jnp.where(x >= 0, pos_scale * x, neg_scale * x)
    y = y + jnp.tanh(x) * third                      # EUP slot, effectively free
    o_ref[...] = y.astype(o_ref.dtype)


def act_prt(x, prelu_weight):
    """x: array of any shape (NCHW in the tests). prelu_weight: shape (1,)."""
    orig_shape = x.shape
    dtype = x.dtype
    n = x.size

    # Lane-dense slab width: largest of {1024,512,256,128} that divides n
    # (avoids any pad/slice HBM passes). Fall back to 128 + minimal pad.
    width = None
    for w in (1024, 512, 256, 128):
        if n >= w and n % w == 0:
            width = w
            break
    if width is None:
        width = LANES

    rows = -(-n // width)            # cdiv
    n_pad = rows * width

    xf = x.reshape(-1)
    if n_pad != n:
        xf = jnp.pad(xf, (0, n_pad - n))    # only for tiny / unaligned sizes
    x2d = xf.reshape(rows, width)

    # ~1M elements per block; always a multiple of 8 rows for the listed widths.
    max_block_rows = max(8, BLOCK_ELEMS // width)

    if rows > max_block_rows:
        block_rows = max_block_rows
    elif rows >= 16:
        # Split medium inputs into >= 2 blocks so v7x megacore uses both TCs.
        block_rows = min(max_block_rows, ((-(-rows // 2)) + 7) // 8 * 8)
    else:
        block_rows = rows            # single full-array block (tiny input)

    num_blocks = -(-rows // block_rows)          # ragged last block is fine

    compute_dtype = jnp.bfloat16 if dtype == jnp.bfloat16 else jnp.float32
    alpha = prelu_weight.astype(jnp.float32).reshape(1)

    out2d = pl.pallas_call(
        functools.partial(_act_prt_kernel, compute_dtype=compute_dtype),
        out_shape=jax.ShapeDtypeStruct((rows, width), dtype),
        grid_spec=pltpu.PrefetchScalarGridSpec(
            num_scalar_prefetch=0,
            grid=(num_blocks,),
            in_specs=[
                pl.BlockSpec(memory_space=pltpu.MemorySpace.SMEM),     # alpha scalar
                pl.BlockSpec((block_rows, width), lambda i: (i, 0)),   # x row-block
            ],
            out_specs=pl.BlockSpec((block_rows, width), lambda i: (i, 0)),
        ),
        compiler_params=pltpu.CompilerParams(
            dimension_semantics=("parallel",),   # megacore sharding on v7x
            vmem_limit_bytes=32 << 20,           # 4 MiB blocks x 2 bufs x (in+out)
        ),
    )(alpha, x2d)

    if n_pad != n:
        out = out2d.reshape(-1)[:n].reshape(orig_shape)
    else:
        out = out2d.reshape(orig_shape)
    return out


def act_prt_ref(x, prelu_weight):
    """Pure-JAX reference matching the PyTorch act_PRT module."""
    a = prelu_weight.reshape(())
    relu = jnp.maximum(x, 0.0)
    prelu = jnp.where(x >= 0.0, x, a * x)
    return (relu + prelu + jnp.tanh(x)) / 3.0


def _check(x, prelu_weight):
    out = jax.block_until_ready(act_prt(x, prelu_weight))
    ref = act_prt_ref(x, prelu_weight)
    assert out.shape == x.shape and out.dtype == x.dtype
    assert jnp.allclose(out, ref, atol=1e-5, rtol=1e-5)


if __name__ == "__main__":
    key = jax.random.PRNGKey(0)
    # PReLU(num_parameters=1) default init: weight = 0.25 (deterministic).
    prelu_weight = jnp.array([0.25], dtype=jnp.float32)

    # Small NCHW input, consistent with a conv-style activation module.
    k0, k1, k2 = jax.random.split(key, 3)
    x_small = jax.random.normal(k0, (2, 4, 16, 16), dtype=jnp.float32)
    _check(x_small, prelu_weight)

    # Medium input: exercises the multi-block (>= 2 blocks) grid path.
    x_med = jax.random.normal(k1, (4, 8, 32, 32), dtype=jnp.float32)
    _check(x_med, prelu_weight)

    # Unaligned size: exercises the pad / tail-slice fallback path.
    x_odd = jax.random.normal(k2, (2, 3, 5, 7), dtype=jnp.float32)
    _check(x_odd, prelu_weight)

    print("KERNEL_OK")
</pallas_src>

<mosaic_0001>
module attributes {stable_mosaic.version = 11 : i64} {
  func.func @_act_prt_kernel(%arg0: i32, %arg1: memref<1xf32, #tpu.memory_space<smem>>, %arg2: memref<2x1024xf32, #tpu.memory_space<vmem>>, %arg3: memref<2x1024xf32, #tpu.memory_space<vmem>>) attributes {dimension_semantics = [#tpu.dimension_semantics<parallel>], iteration_bounds = array<i64: 1>, scalar_prefetch = 0 : i64, scratch_operands = 0 : i64, tpu.core_type = #tpu.core_type<tc>, window_params = [{transform_indices = @transform_0, window_bounds = array<i64: 1>}, {transform_indices = @transform_1, window_bounds = array<i64: 2, 1024>}, {transform_indices = @transform_2, window_bounds = array<i64: 2, 1024>}]} {
    %c0 = arith.constant 0 : index
    %0 = memref.load %arg1[%c0] : memref<1xf32, #tpu.memory_space<smem>>
    %c0_0 = arith.constant 0 : index
    %c0_1 = arith.constant 0 : index
    %1 = vector.load %arg2[%c0_0, %c0_1] : memref<2x1024xf32, #tpu.memory_space<vmem>>, vector<2x1024xf32>
    %cst = arith.constant 0.333333343 : f32
    %2 = arith.mulf %0, %cst : f32
    %cst_2 = arith.constant 0.000000e+00 : f32
    %3 = vector.broadcast %cst_2 : f32 to vector<2x1024xf32>
    %4 = arith.cmpf oge, %1, %3 : vector<2x1024xf32>
    %cst_3 = arith.constant 0.666666686 : f32
    %5 = vector.broadcast %cst_3 : f32 to vector<2x1024xf32>
    %6 = arith.mulf %5, %1 : vector<2x1024xf32>
    %7 = vector.broadcast %2 : f32 to vector<2x1024xf32>
    %8 = arith.mulf %7, %1 : vector<2x1024xf32>
    %9 = arith.select %4, %6, %8 : vector<2x1024xi1>, vector<2x1024xf32>
    %10 = math.tanh %1 : vector<2x1024xf32>
    %cst_4 = arith.constant 0.333333343 : f32
    %11 = vector.broadcast %cst_4 : f32 to vector<2x1024xf32>
    %12 = arith.mulf %10, %11 : vector<2x1024xf32>
    %13 = arith.addf %9, %12 : vector<2x1024xf32>
    %c0_5 = arith.constant 0 : index
    %c0_6 = arith.constant 0 : index
    %14 = vector.load %arg3[%c0_5, %c0_6] : memref<2x1024xf32, #tpu.memory_space<vmem>>, vector<2x1024xf32>
    tpu.vector_store %arg3[%c0_5, %c0_6], %13 {strides = array<i32>} : memref<2x1024xf32, #tpu.memory_space<vmem>>, vector<2x1024xf32>,
    return
  }
  func.func @transform_0(%arg0: i32) -> i32 {
    %c0_i32 = arith.constant 0 : i32
    %c0_i32_0 = arith.constant 0 : i32
    return %c0_i32 : i32
  }
  func.func @transform_1(%arg0: i32) -> (i32, i32) {
    %c0_i32 = arith.constant 0 : i32
    %c0_i32_0 = arith.constant 0 : i32
    return %arg0, %c0_i32 : i32, i32
  }
  func.func @transform_2(%arg0: i32) -> (i32, i32) {
    %c0_i32 = arith.constant 0 : i32
    %c0_i32_0 = arith.constant 0 : i32
    return %arg0, %c0_i32 : i32, i32
  }
}

</mosaic_0001>

<llo_original>
// kernel: tpu_custom_call.1
$region0: #{tpu_custom_call.1}
  #allocation0 [shape = 'u32[]', space=smem, size = 0x4, offset = 0x4, fixed_abs, tag = 'smem constant byte address 0x4 - core index']
  #allocation1 [shape = 'u32[144,128]{1,0:T(1,128)}', space=vmem, size = 0x12000, scoped, tag = 'internal scratch']
  #allocation2 [shape = 'f32[1]{0:T(128)S(6)}', space=smem, size = 0x200, scoped, tag = 'scoped memory for tpu_custom_call.1']
  %s0 = inlined_call_operand.<no memory space> [shape: f32[1], index: 0, kind: input, shape index: {}]
  %s1 = inlined_call_operand.hbm [shape: f32[2,1024], index: 1, kind: input, shape index: {}]
  %s2 = inlined_call_operand.hbm [shape: f32[2,1024], index: 2, kind: output, shape index: {}]
  %s3 = sld [smem:[#allocation0]]
  $region22: #{tpu_custom_call.1} parent=0
    _
  %s5 = ssub.s32 1, %s3
  %s6 = scalar_select 0, %s5, %s3
  %7 = sst [smem:[#allocation2]] %s0
  $region1: #{tpu_custom_call.1} parent=0
    #allocation3 [shape = 'u8[8192]{0}', space=vmem, size = 0x2000, scoped, tag = 'input window, operand 1, single buffered']
    #allocation4 [shape = 's32[1]{0}', space=sflag, size = 0x4, scoped, tag = 'scoped memory for tpu_custom_call.1']
    #allocation5 [shape = 's32[1]{0}', space=sflag, size = 0x4, scoped, tag = 'scoped memory for tpu_custom_call.1']
    #allocation6 [shape = 'u8[8192]{0}', space=vmem, size = 0x2000, scoped, tag = 'output window, operand 0, single buffered']
    %8 = vsyncpa [#allocation4], 0
    %9 = vsyncpa [#allocation5], 0
    // Predicated region
    $region2: #{tpu_custom_call.1} parent=1 // pred_check
      _
    $region3: #{tpu_custom_call.1} parent=1 // pred_check_branch
      %11 = sbr.rel (0) target = $region5
    $region4: #{tpu_custom_call.1} parent=1 // pred_region
      _
    $region5: #{tpu_custom_call.1} parent=1 // pred_fallthru
      _
    // Predicated region
    $region6: #{tpu_custom_call.1} parent=1 // pred_check
      _
    $region7: #{tpu_custom_call.1} parent=1 // pred_check_branch
      %13 = sbr.rel (0) target = $region9
    $region8: #{tpu_custom_call.1} parent=1 // pred_region
      %s15 = ssub.s32 256, 256
      %16 = vsyncadd [#allocation4], %s15
      %s18 = sshll.u32 [#allocation3], 4
      %s19 = int_to_ptr.vmem [resolvable:$true] %s18
      %21 = dma.hbm_to_vmem [thread:$0]  %s1, 256, %s19, [#allocation4]
    $region9: #{tpu_custom_call.1} parent=1 // pred_fallthru
      _
    // Predicated region
    $region10: #{tpu_custom_call.1} parent=1 // pred_check
      _
    $region11: #{tpu_custom_call.1} parent=1 // pred_check_branch
      %23 = sbr.rel (0) target = $region13
    $region12: #{tpu_custom_call.1} parent=1 // pred_region
      %24 = dma.done [#allocation4], 256
    $region13: #{tpu_custom_call.1} parent=1 // pred_fallthru
      _
    %s25 = sld [smem:[#allocation2]]
    %v26 = vld [vmem:[#allocation3] sm:$0xff]
    %v27 = vld [vmem:[#allocation3 + $0x8] sm:$0xff]
    %s28 = smul.f32 %s25, 0.33333334
    %vm29 = vcmp.ge.f32.partialorder %v26, 0.0
    %vm30 = vcmp.ge.f32.partialorder %v27, 0.0
    %v31 = vmul.f32 %v26, 0.6666667
    %v32 = vmul.f32 %v27, 0.6666667
    %v33 = vstv %s28
    %v34 = vmul.f32 %v33, %v26
    %v35 = vmul.f32 %v33, %v27
    %v36 = vsel %vm29, %v31, %v34
    %v37 = vsel %vm30, %v32, %v35
    %v38 = vtanh.pop %v26
    %v39 = vtanh.pop %v27
    %v40 = vmul.f32 %v38, 0.33333334
    %v41 = vmul.f32 %v39, 0.33333334
    %v42 = vadd.f32 %v36, %v40
    %v43 = vadd.f32 %v37, %v41
    %44 = vst [vmem:[#allocation6] sm:$0xff] %v42
    %45 = vst [vmem:[#allocation6 + $0x8] sm:$0xff] %v43
    // Predicated region
    $region14: #{tpu_custom_call.1} parent=1 // pred_check
      _
    $region15: #{tpu_custom_call.1} parent=1 // pred_check_branch
      %47 = sbr.rel (0) target = $region17
    $region16: #{tpu_custom_call.1} parent=1 // pred_region
      %s49 = ssub.s32 256, 256
      %50 = vsyncadd [#allocation5], %s49
      %s52 = sshll.u32 [#allocation6], 4
      %s53 = int_to_ptr.vmem [resolvable:$true] %s52
      %55 = dma.vmem_to_hbm [thread:$0]  %s53, 256, %s2, [#allocation5]
    $region17: #{tpu_custom_call.1} parent=1 // pred_fallthru
      _
    // Predicated region
    $region18: #{tpu_custom_call.1} parent=1 // pred_check
      _
    $region19: #{tpu_custom_call.1} parent=1 // pred_check_branch
      %57 = sbr.rel (0) target = $region21
    $region20: #{tpu_custom_call.1} parent=1 // pred_region
      %58 = dma.done [#allocation5], 256
    $region21: #{tpu_custom_call.1} parent=1 // pred_fallthru
      _
    %59 = vsyncpa [#allocation4], 1
    %60 = vsyncpa [#allocation5], 1

</llo_original>
